<compile_context>
chip_gen: v7x
topology: tpu7x:2x2x1
jax: 0.10.0
libtpu: 0.0.40
codegen_flags: <defaults>
</compile_context>

<pallas_src>
import jax
import jax.numpy as jnp
from jax.experimental import pallas as pl
from jax.experimental.pallas import tpu as pltpu


def mlp_kernel(x_ref, w1_ref, b1_ref, w2_ref, b2_ref, w3_ref, b3_ref, o_ref):
    # Layer 1: (TB, 256)bf16 @ (256, 512)bf16 -> f32 acc, bias + ReLU in f32.
    h1 = jnp.dot(x_ref[...], w1_ref[...], preferred_element_type=jnp.float32)
    h1 = jnp.maximum(h1 + b1_ref[...], 0.0).astype(jnp.bfloat16)
    # Layer 2: (TB, 512)bf16 @ (512, 256)bf16 -> f32 acc, bias + ReLU in f32.
    h2 = jnp.dot(h1, w2_ref[...], preferred_element_type=jnp.float32)
    h2 = jnp.maximum(h2 + b2_ref[...], 0.0).astype(jnp.bfloat16)
    # Layer 3: (TB, 256)bf16 @ (256, 128)bf16 -> f32 acc, bias. Lane-dense store.
    out = jnp.dot(h2, w3_ref[...], preferred_element_type=jnp.float32) + b3_ref[...]
    o_ref[...] = out.astype(o_ref.dtype)


def mlp_forward(x, w1, b1, w2, b2, w3, b3):
    B = x.shape[0]
    x2d = x.reshape(B, -1).astype(jnp.bfloat16)       # Flatten (plain JAX glue)
    D_in = x2d.shape[1]                               # 256
    H1 = w1.shape[1]                                  # 512
    H2 = w2.shape[1]                                  # 256
    N_out = w3.shape[1]                               # 10
    N_pad = 128                                       # lane-dense output width

    # Batch tile: 512 rows for big batches, else smallest multiple of 8 >= B.
    TB = 512 if B >= 512 else max(8, ((B + 7) // 8) * 8)
    B_pad = pl.cdiv(B, TB) * TB
    if B_pad != B:
        x2d = jnp.pad(x2d, ((0, B_pad - B), (0, 0)))

    # bf16 MXU operands; biases stay f32.
    w1b = w1.astype(jnp.bfloat16)
    w2b = w2.astype(jnp.bfloat16)
    w3b = jnp.pad(w3, ((0, 0), (0, N_pad - N_out))).astype(jnp.bfloat16)
    b1r = b1.reshape(1, -1).astype(jnp.float32)
    b2r = b2.reshape(1, -1).astype(jnp.float32)
    b3r = jnp.pad(b3.reshape(1, -1), ((0, 0), (0, N_pad - N_out))).astype(jnp.float32)

    resident = lambda shape: pl.BlockSpec(shape, lambda i: (0, 0))

    flops = 2 * B_pad * (D_in * H1 + H1 * H2 + H2 * N_pad)
    bytes_accessed = (
        x2d.size * 2 + w1b.size * 2 + w2b.size * 2 + w3b.size * 2
        + (b1r.size + b2r.size + b3r.size) * 4
        + B_pad * N_pad * 4
    )

    out = pl.pallas_call(
        mlp_kernel,
        out_shape=jax.ShapeDtypeStruct((B_pad, N_pad), jnp.float32),
        grid=(B_pad // TB,),
        in_specs=[
            pl.BlockSpec((TB, D_in), lambda i: (i, 0)),   # activation tile
            resident(w1b.shape), resident(b1r.shape),     # weights/biases stay put
            resident(w2b.shape), resident(b2r.shape),
            resident(w3b.shape), resident(b3r.shape),
        ],
        out_specs=pl.BlockSpec((TB, N_pad), lambda i: (i, 0)),
        compiler_params=pltpu.CompilerParams(
            dimension_semantics=("parallel",),
        ),
        cost_estimate=pl.CostEstimate(
            flops=flops, transcendentals=0, bytes_accessed=bytes_accessed),
    )(x2d, w1b, b1r, w2b, b2r, w3b, b3r)

    # Slice off batch and lane padding outside the kernel.
    return out[:B, :N_out]


def init_params(key):
    # Deterministic init mimicking PyTorch's default Linear init:
    # U(-1/sqrt(fan_in), 1/sqrt(fan_in)) for both weight and bias.
    def linear(key, fan_in, fan_out):
        kw, kb = jax.random.split(key)
        bound = 1.0 / jnp.sqrt(fan_in)
        w = jax.random.uniform(kw, (fan_in, fan_out), jnp.float32, -bound, bound)
        b = jax.random.uniform(kb, (fan_out,), jnp.float32, -bound, bound)
        return w, b

    k1, k2, k3 = jax.random.split(key, 3)
    w1, b1 = linear(k1, 16 * 16, 512)
    w2, b2 = linear(k2, 512, 256)
    w3, b3 = linear(k3, 256, 10)
    return w1, b1, w2, b2, w3, b3


def reference_forward(x, w1, b1, w2, b2, w3, b3):
    # Pure-JAX f32 reference (PyTorch-equivalent semantics).
    x2d = x.reshape(x.shape[0], -1)
    h1 = jnp.maximum(x2d @ w1 + b1, 0.0)
    h2 = jnp.maximum(h1 @ w2 + b2, 0.0)
    return h2 @ w3 + b3


if __name__ == "__main__":
    key = jax.random.PRNGKey(0)
    kx, kp = jax.random.split(key)

    # Small batch of 16x16 "images" consistent with Linear(16*16, 512).
    x = jax.random.normal(kx, (2, 16, 16), jnp.float32)
    params = init_params(kp)

    out = mlp_forward(x, *params)
    out = jax.block_until_ready(out)

    ref = reference_forward(x, *params)
    assert out.shape == (2, 10)
    # bf16 MXU operands with f32 accumulation -> slightly looser tolerance.
    assert jnp.allclose(out, ref, atol=5e-2, rtol=5e-2), (
        float(jnp.max(jnp.abs(out - ref))))

    print("KERNEL_OK")
</pallas_src>

<mosaic_0001>
module attributes {stable_mosaic.version = 11 : i64} {
  func.func @mlp_kernel(%arg0: i32, %arg1: memref<8x256xbf16, #tpu.memory_space<vmem>>, %arg2: memref<256x512xbf16, #tpu.memory_space<vmem>>, %arg3: memref<1x512xf32, #tpu.memory_space<vmem>>, %arg4: memref<512x256xbf16, #tpu.memory_space<vmem>>, %arg5: memref<1x256xf32, #tpu.memory_space<vmem>>, %arg6: memref<256x128xbf16, #tpu.memory_space<vmem>>, %arg7: memref<1x128xf32, #tpu.memory_space<vmem>>, %arg8: memref<8x128xf32, #tpu.memory_space<vmem>>) attributes {dimension_semantics = [#tpu.dimension_semantics<parallel>], iteration_bounds = array<i64: 1>, scalar_prefetch = 0 : i64, scratch_operands = 0 : i64, tpu.core_type = #tpu.core_type<tc>, window_params = [{transform_indices = @transform_0, window_bounds = array<i64: 8, 256>}, {pipeline_mode = #tpu.pipeline_mode<synchronous>, transform_indices = @transform_1, window_bounds = array<i64: 256, 512>}, {pipeline_mode = #tpu.pipeline_mode<synchronous>, transform_indices = @transform_2, window_bounds = array<i64: 1, 512>}, {pipeline_mode = #tpu.pipeline_mode<synchronous>, transform_indices = @transform_3, window_bounds = array<i64: 512, 256>}, {pipeline_mode = #tpu.pipeline_mode<synchronous>, transform_indices = @transform_4, window_bounds = array<i64: 1, 256>}, {pipeline_mode = #tpu.pipeline_mode<synchronous>, transform_indices = @transform_5, window_bounds = array<i64: 256, 128>}, {pipeline_mode = #tpu.pipeline_mode<synchronous>, transform_indices = @transform_6, window_bounds = array<i64: 1, 128>}, {transform_indices = @transform_7, window_bounds = array<i64: 8, 128>}]} {
    %c0 = arith.constant 0 : index
    %c0_0 = arith.constant 0 : index
    %0 = vector.load %arg1[%c0, %c0_0] : memref<8x256xbf16, #tpu.memory_space<vmem>>, vector<8x256xbf16>
    %c0_1 = arith.constant 0 : index
    %c0_2 = arith.constant 0 : index
    %1 = vector.load %arg2[%c0_1, %c0_2] : memref<256x512xbf16, #tpu.memory_space<vmem>>, vector<256x512xbf16>
    %cst = arith.constant dense<0.000000e+00> : vector<8x512xf32>
    %2 = tpu.matmul %0, %1, %cst {dimension_numbers = #tpu.dot_dimension_numbers<[1], [0], [0], [1], [0, 0, 1, 1], [], []>} : vector<8x256xbf16>, vector<256x512xbf16>, vector<8x512xf32> -> vector<8x512xf32>
    %c0_3 = arith.constant 0 : index
    %c0_4 = arith.constant 0 : index
    %3 = vector.load %arg3[%c0_3, %c0_4] : memref<1x512xf32, #tpu.memory_space<vmem>>, vector<1x512xf32>
    %4 = vector.broadcast %3 : vector<1x512xf32> to vector<8x512xf32>
    %5 = arith.addf %2, %4 : vector<8x512xf32>
    %cst_5 = arith.constant 0.000000e+00 : f32
    %6 = vector.broadcast %cst_5 : f32 to vector<8x512xf32>
    %7 = arith.maximumf %5, %6 : vector<8x512xf32>
    %8 = arith.truncf %7 : vector<8x512xf32> to vector<8x512xbf16>
    %c0_6 = arith.constant 0 : index
    %c0_7 = arith.constant 0 : index
    %9 = vector.load %arg4[%c0_6, %c0_7] : memref<512x256xbf16, #tpu.memory_space<vmem>>, vector<512x256xbf16>
    %cst_8 = arith.constant dense<0.000000e+00> : vector<8x256xf32>
    %10 = tpu.matmul %8, %9, %cst_8 {dimension_numbers = #tpu.dot_dimension_numbers<[1], [0], [0], [1], [0, 0, 1, 1], [], []>} : vector<8x512xbf16>, vector<512x256xbf16>, vector<8x256xf32> -> vector<8x256xf32>
    %c0_9 = arith.constant 0 : index
    %c0_10 = arith.constant 0 : index
    %11 = vector.load %arg5[%c0_9, %c0_10] : memref<1x256xf32, #tpu.memory_space<vmem>>, vector<1x256xf32>
    %12 = vector.broadcast %11 : vector<1x256xf32> to vector<8x256xf32>
    %13 = arith.addf %10, %12 : vector<8x256xf32>
    %cst_11 = arith.constant 0.000000e+00 : f32
    %14 = vector.broadcast %cst_11 : f32 to vector<8x256xf32>
    %15 = arith.maximumf %13, %14 : vector<8x256xf32>
    %16 = arith.truncf %15 : vector<8x256xf32> to vector<8x256xbf16>
    %c0_12 = arith.constant 0 : index
    %c0_13 = arith.constant 0 : index
    %17 = vector.load %arg6[%c0_12, %c0_13] : memref<256x128xbf16, #tpu.memory_space<vmem>>, vector<256x128xbf16>
    %cst_14 = arith.constant dense<0.000000e+00> : vector<8x128xf32>
    %18 = tpu.matmul %16, %17, %cst_14 {dimension_numbers = #tpu.dot_dimension_numbers<[1], [0], [0], [1], [0, 0, 1, 1], [], []>} : vector<8x256xbf16>, vector<256x128xbf16>, vector<8x128xf32> -> vector<8x128xf32>
    %c0_15 = arith.constant 0 : index
    %c0_16 = arith.constant 0 : index
    %19 = vector.load %arg7[%c0_15, %c0_16] : memref<1x128xf32, #tpu.memory_space<vmem>>, vector<1x128xf32>
    %20 = vector.broadcast %19 : vector<1x128xf32> to vector<8x128xf32>
    %21 = arith.addf %18, %20 : vector<8x128xf32>
    %c0_17 = arith.constant 0 : index
    %c0_18 = arith.constant 0 : index
    %22 = vector.load %arg8[%c0_17, %c0_18] : memref<8x128xf32, #tpu.memory_space<vmem>>, vector<8x128xf32>
    tpu.vector_store %arg8[%c0_17, %c0_18], %21 {strides = array<i32>} : memref<8x128xf32, #tpu.memory_space<vmem>>, vector<8x128xf32>,
    return
  }
  func.func @transform_0(%arg0: i32) -> (i32, i32) {
    %c0_i32 = arith.constant 0 : i32
    %c0_i32_0 = arith.constant 0 : i32
    return %arg0, %c0_i32 : i32, i32
  }
  func.func @transform_1(%arg0: i32) -> (i32, i32) {
    %c0_i32 = arith.constant 0 : i32
    %c0_i32_0 = arith.constant 0 : i32
    %c0_i32_1 = arith.constant 0 : i32
    return %c0_i32, %c0_i32_0 : i32, i32
  }
  func.func @transform_2(%arg0: i32) -> (i32, i32) {
    %c0_i32 = arith.constant 0 : i32
    %c0_i32_0 = arith.constant 0 : i32
    %c0_i32_1 = arith.constant 0 : i32
    return %c0_i32, %c0_i32_0 : i32, i32
  }
  func.func @transform_3(%arg0: i32) -> (i32, i32) {
    %c0_i32 = arith.constant 0 : i32
    %c0_i32_0 = arith.constant 0 : i32
    %c0_i32_1 = arith.constant 0 : i32
    return %c0_i32, %c0_i32_0 : i32, i32
  }
  func.func @transform_4(%arg0: i32) -> (i32, i32) {
    %c0_i32 = arith.constant 0 : i32
    %c0_i32_0 = arith.constant 0 : i32
    %c0_i32_1 = arith.constant 0 : i32
    return %c0_i32, %c0_i32_0 : i32, i32
  }
  func.func @transform_5(%arg0: i32) -> (i32, i32) {
    %c0_i32 = arith.constant 0 : i32
    %c0_i32_0 = arith.constant 0 : i32
    %c0_i32_1 = arith.constant 0 : i32
    return %c0_i32, %c0_i32_0 : i32, i32
  }
  func.func @transform_6(%arg0: i32) -> (i32, i32) {
    %c0_i32 = arith.constant 0 : i32
    %c0_i32_0 = arith.constant 0 : i32
    %c0_i32_1 = arith.constant 0 : i32
    return %c0_i32, %c0_i32_0 : i32, i32
  }
  func.func @transform_7(%arg0: i32) -> (i32, i32) {
    %c0_i32 = arith.constant 0 : i32
    %c0_i32_0 = arith.constant 0 : i32
    return %arg0, %c0_i32 : i32, i32
  }
}

</mosaic_0001>

<llo_original>
// kernel: tpu_custom_call.1
$region0: #{tpu_custom_call.1}
  #allocation0 [shape = 'u32[]', space=smem, size = 0x4, offset = 0x4, fixed_abs, tag = 'smem constant byte address 0x4 - core index']
  #allocation1 [shape = 'u32[144,128]{1,0:T(1,128)}', space=vmem, size = 0x12000, scoped, tag = 'internal scratch']
  %s0 = inlined_call_operand.hbm [shape: bf16[8,256], index: 0, kind: input, shape index: {}]
  %s1 = inlined_call_operand.hbm [shape: bf16[256,512], index: 1, kind: input, shape index: {}]
  %s2 = inlined_call_operand.vmem [shape: f32[1,512], index: 2, kind: input, shape index: {}]
  %s3 = inlined_call_operand.hbm [shape: bf16[512,256], index: 3, kind: input, shape index: {}]
  %s4 = inlined_call_operand.vmem [shape: f32[1,256], index: 4, kind: input, shape index: {}]
  %s5 = inlined_call_operand.hbm [shape: bf16[256,128], index: 5, kind: input, shape index: {}]
  %s6 = inlined_call_operand.vmem [shape: f32[1,128], index: 6, kind: input, shape index: {}]
  %s7 = inlined_call_operand.hbm [shape: f32[8,128], index: 7, kind: output, shape index: {}]
  %s8 = sld [smem:[#allocation0]]
  $region54: #{tpu_custom_call.1} parent=0
    _
  %s10 = ssub.s32 1, %s8
  %s11 = scalar_select 0, %s10, %s8
  $region1: #{tpu_custom_call.1} parent=0
    #allocation2 [shape = 'u8[4096]{0}', space=vmem, size = 0x1000, scoped, tag = 'input window, operand 0, single buffered']
    #allocation3 [shape = 's32[1]{0}', space=sflag, size = 0x4, scoped, tag = 'scoped memory for tpu_custom_call.1']
    #allocation4 [shape = 's32[1]{0}', space=sflag, size = 0x4, scoped, tag = 'scoped memory for tpu_custom_call.1']
    #allocation5 [shape = 'u8[262144]{0}', space=vmem, size = 0x40000, scoped, tag = 'input window, operand 1, single buffered']
    #allocation6 [shape = 's32[1]{0}', space=sflag, size = 0x4, scoped, tag = 'scoped memory for tpu_custom_call.1']
    #allocation7 [shape = 'u8[262144]{0}', space=vmem, size = 0x40000, scoped, tag = 'input window, operand 3, single buffered']
    #allocation8 [shape = 'u8[65536]{0}', space=vmem, size = 0x10000, scoped, tag = 'input window, operand 5, single buffered']
    #allocation9 [shape = 's32[1]{0}', space=sflag, size = 0x4, scoped, tag = 'scoped memory for tpu_custom_call.1']
    #allocation10 [shape = 'u8[4096]{0}', space=vmem, size = 0x1000, scoped, tag = 'output window, operand 0, single buffered']
    %12 = vsyncpa [#allocation3], 0
    %13 = vsyncpa [#allocation6], 0
    %14 = vsyncpa [#allocation9], 0
    %15 = vsyncpa [#allocation4], 0
    // Predicated region
    $region2: #{tpu_custom_call.1} parent=1 // pred_check
      _
    $region3: #{tpu_custom_call.1} parent=1 // pred_check_branch
      %17 = sbr.rel (0) target = $region5
    $region4: #{tpu_custom_call.1} parent=1 // pred_region
      %s19 = ssub.s32 128, 128
      %20 = vsyncadd [#allocation3], %s19
      %s22 = sshll.u32 [#allocation2], 4
      %s23 = int_to_ptr.vmem [resolvable:$true] %s22
      %25 = dma.hbm_to_vmem [thread:$0]  %s0, 128, %s23, [#allocation3]
    $region5: #{tpu_custom_call.1} parent=1 // pred_fallthru
      _
    // Predicated region
    $region6: #{tpu_custom_call.1} parent=1 // pred_check
      _
    $region7: #{tpu_custom_call.1} parent=1 // pred_check_branch
      %27 = sbr.rel (0) target = $region9
    $region8: #{tpu_custom_call.1} parent=1 // pred_region
      %s29 = ssub.s32 8192, 8192
      %30 = vsyncadd [#allocation6], %s29
      %s31 = sshll.u32 [#allocation5], 4
      %s32 = int_to_ptr.vmem [resolvable:$true] %s31
      %37 = dma.hbm_to_vmem [thread:$0]  %s1, 8192, %s32, [#allocation6], 256, 256, 16
    $region9: #{tpu_custom_call.1} parent=1 // pred_fallthru
      _
    // Predicated region
    $region10: #{tpu_custom_call.1} parent=1 // pred_check
      _
    $region11: #{tpu_custom_call.1} parent=1 // pred_check_branch
      %39 = sbr.rel (0) target = $region13
    $region12: #{tpu_custom_call.1} parent=1 // pred_region
      _
    $region13: #{tpu_custom_call.1} parent=1 // pred_fallthru
      _
    // Predicated region
    $region14: #{tpu_custom_call.1} parent=1 // pred_check
      _
    $region15: #{tpu_custom_call.1} parent=1 // pred_check_branch
      %41 = sbr.rel (0) target = $region17
    $region16: #{tpu_custom_call.1} parent=1 // pred_region
      %s43 = ssub.s32 8192, 8192
      %44 = vsyncadd [#allocation6], %s43
      %s45 = sshll.u32 [#allocation7], 4
      %s46 = int_to_ptr.vmem [resolvable:$true] %s45
      %51 = dma.hbm_to_vmem [thread:$0]  %s3, 8192, %s46, [#allocation6], 128, 128, 8
    $region17: #{tpu_custom_call.1} parent=1 // pred_fallthru
      _
    // Predicated region
    $region18: #{tpu_custom_call.1} parent=1 // pred_check
      _
    $region19: #{tpu_custom_call.1} parent=1 // pred_check_branch
      %53 = sbr.rel (0) target = $region21
    $region20: #{tpu_custom_call.1} parent=1 // pred_region
      _
    $region21: #{tpu_custom_call.1} parent=1 // pred_fallthru
      _
    // Predicated region
    $region22: #{tpu_custom_call.1} parent=1 // pred_check
      _
    $region23: #{tpu_custom_call.1} parent=1 // pred_check_branch
      %55 = sbr.rel (0) target = $region25
    $region24: #{tpu_custom_call.1} parent=1 // pred_region
      %s57 = ssub.s32 2048, 2048
      %58 = vsyncadd [#allocation9], %s57
      %s59 = sshll.u32 [#allocation8], 4
      %s60 = int_to_ptr.vmem [resolvable:$true] %s59
      %65 = dma.hbm_to_vmem [thread:$0]  %s5, 2048, %s60, [#allocation9], 64, 64, 4
    $region25: #{tpu_custom_call.1} parent=1 // pred_fallthru
      _
    // Predicated region
    $region26: #{tpu_custom_call.1} parent=1 // pred_check
      _
    $region27: #{tpu_custom_call.1} parent=1 // pred_check_branch
      %67 = sbr.rel (0) target = $region29
    $region28: #{tpu_custom_call.1} parent=1 // pred_region
      _
    $region29: #{tpu_custom_call.1} parent=1 // pred_fallthru
      _
    // Predicated region
    $region30: #{tpu_custom_call.1} parent=1 // pred_check
      _
    $region31: #{tpu_custom_call.1} parent=1 // pred_check_branch
      %69 = sbr.rel (0) target = $region33
    $region32: #{tpu_custom_call.1} parent=1 // pred_region
      %70 = dma.done [#allocation3], 128
    $region33: #{tpu_custom_call.1} parent=1 // pred_fallthru
      _
    // Predicated region
    $region34: #{tpu_custom_call.1} parent=1 // pred_check
      _
    $region35: #{tpu_custom_call.1} parent=1 // pred_check_branch
      %72 = sbr.rel (0) target = $region37
    $region36: #{tpu_custom_call.1} parent=1 // pred_region
      %73 = dma.done [#allocation6], 8192
    $region37: #{tpu_custom_call.1} parent=1 // pred_fallthru
      _
    // Predicated region
    $region38: #{tpu_custom_call.1} parent=1 // pred_check
      _
    $region39: #{tpu_custom_call.1} parent=1 // pred_check_branch
      %75 = sbr.rel (0) target = $region41
    $region40: #{tpu_custom_call.1} parent=1 // pred_region
      %76 = dma.done [#allocation6], 8192
    $region41: #{tpu_custom_call.1} parent=1 // pred_fallthru
      _
    // Predicated region
    $region42: #{tpu_custom_call.1} parent=1 // pred_check
      _
    $region43: #{tpu_custom_call.1} parent=1 // pred_check_branch
      %78 = sbr.rel (0) target = $region45
    $region44: #{tpu_custom_call.1} parent=1 // pred_region
      %79 = dma.done [#allocation9], 2048
    $region45: #{tpu_custom_call.1} parent=1 // pred_fallthru
      _
    %v81 = vld [vmem:[#allocation2] sm:$0xff]
    %v82 = vld [vmem:[#allocation5] sm:$0xff]
    %v83 = vld [vmem:[#allocation5 + $0x8] sm:$0xff]
    %v84 = vld [vmem:[#allocation5 + $0x10] sm:$0xff]
    %v85 = vld [vmem:[#allocation5 + $0x18] sm:$0xff]
    %v86 = vld [vmem:[#allocation5 + $0x20] sm:$0xff]
    %v87 = vld [vmem:[#allocation5 + $0x28] sm:$0xff]
    %v88 = vld [vmem:[#allocation5 + $0x30] sm:$0xff]
    %v89 = vld [vmem:[#allocation5 + $0x38] sm:$0xff]
    %v90 = vld [vmem:[#allocation5 + $0x40] sm:$0xff]
    %v91 = vld [vmem:[#allocation5 + $0x48] sm:$0xff]
    %v92 = vld [vmem:[#allocation5 + $0x50] sm:$0xff]
    %v93 = vld [vmem:[#allocation5 + $0x58] sm:$0xff]
    %v94 = vld [vmem:[#allocation5 + $0x60] sm:$0xff]
    %v95 = vld [vmem:[#allocation5 + $0x68] sm:$0xff]
    %v96 = vld [vmem:[#allocation5 + $0x70] sm:$0xff]
    %v97 = vld [vmem:[#allocation5 + $0x78] sm:$0xff]
    %v98 = vld [vmem:[#allocation5 + $0x80] sm:$0xff]
    %v99 = vld [vmem:[#allocation5 + $0x88] sm:$0xff]
    %v100 = vld [vmem:[#allocation5 + $0x90] sm:$0xff]
    %v101 = vld [vmem:[#allocation5 + $0x98] sm:$0xff]
    %v102 = vld [vmem:[#allocation5 + $0xa0] sm:$0xff]
    %v103 = vld [vmem:[#allocation5 + $0xa8] sm:$0xff]
    %v104 = vld [vmem:[#allocation5 + $0xb0] sm:$0xff]
    %v105 = vld [vmem:[#allocation5 + $0xb8] sm:$0xff]
    %v106 = vld [vmem:[#allocation5 + $0xc0] sm:$0xff]
    %v107 = vld [vmem:[#allocation5 + $0xc8] sm:$0xff]
    %v108 = vld [vmem:[#allocation5 + $0xd0] sm:$0xff]
    %v109 = vld [vmem:[#allocation5 + $0xd8] sm:$0xff]
    %v110 = vld [vmem:[#allocation5 + $0xe0] sm:$0xff]
    %v111 = vld [vmem:[#allocation5 + $0xe8] sm:$0xff]
    %v112 = vld [vmem:[#allocation5 + $0xf0] sm:$0xff]
    %v113 = vld [vmem:[#allocation5 + $0xf8] sm:$0xff]
    %v114 = vld [vmem:[#allocation5 + $0x100] sm:$0xff]
    %v115 = vld [vmem:[#allocation5 + $0x108] sm:$0xff]
    %v116 = vld [vmem:[#allocation5 + $0x110] sm:$0xff]
    %v117 = vld [vmem:[#allocation5 + $0x118] sm:$0xff]
    %v118 = vld [vmem:[#allocation5 + $0x120] sm:$0xff]
    %v119 = vld [vmem:[#allocation5 + $0x128] sm:$0xff]
    %v120 = vld [vmem:[#allocation5 + $0x130] sm:$0xff]
    %v121 = vld [vmem:[#allocation5 + $0x138] sm:$0xff]
    %v122 = vld [vmem:[#allocation5 + $0x140] sm:$0xff]
    %v123 = vld [vmem:[#allocation5 + $0x148] sm:$0xff]
    %v124 = vld [vmem:[#allocation5 + $0x150] sm:$0xff]
    %v125 = vld [vmem:[#allocation5 + $0x158] sm:$0xff]
    %v126 = vld [vmem:[#allocation5 + $0x160] sm:$0xff]
    %v127 = vld [vmem:[#allocation5 + $0x168] sm:$0xff]
    %v128 = vld [vmem:[#allocation5 + $0x170] sm:$0xff]
    %v129 = vld [vmem:[#allocation5 + $0x178] sm:$0xff]
    %v130 = vld [vmem:[#allocation5 + $0x180] sm:$0xff]
    %v131 = vld [vmem:[#allocation5 + $0x188] sm:$0xff]
    %v132 = vld [vmem:[#allocation5 + $0x190] sm:$0xff]
    %v133 = vld [vmem:[#allocation5 + $0x198] sm:$0xff]
    %v134 = vld [vmem:[#allocation5 + $0x1a0] sm:$0xff]
    %v135 = vld [vmem:[#allocation5 + $0x1a8] sm:$0xff]
    %v136 = vld [vmem:[#allocation5 + $0x1b0] sm:$0xff]
    %v137 = vld [vmem:[#allocation5 + $0x1b8] sm:$0xff]
    %v138 = vld [vmem:[#allocation5 + $0x1c0] sm:$0xff]
    %v139 = vld [vmem:[#allocation5 + $0x1c8] sm:$0xff]
    %v140 = vld [vmem:[#allocation5 + $0x1d0] sm:$0xff]
    %v141 = vld [vmem:[#allocation5 + $0x1d8] sm:$0xff]
    %v142 = vld [vmem:[#allocation5 + $0x1e0] sm:$0xff]
    %v143 = vld [vmem:[#allocation5 + $0x1e8] sm:$0xff]
    %v144 = vld [vmem:[#allocation5 + $0x1f0] sm:$0xff]
    %v145 = vld [vmem:[#allocation5 + $0x1f8] sm:$0xff]
    %v146 = vld [vmem:[%s2] sm:$0xf]
    %v148 = vlaneseq
    %v149 = vshrl.u32 %v148, 7
    %v150 = vsub.s32 0, %v149
    %v151 = vrot.slane %v146, %v150
    %v152 = vlaneseq
    %v153 = vshrl.u32 %v152, 7
    %v154 = vsub.s32 1, %v153
    %v155 = vrot.slane %v146, %v154
    %v156 = vlaneseq
    %v157 = vshrl.u32 %v156, 7
    %v158 = vsub.s32 2, %v157
    %v159 = vrot.slane %v146, %v158
    %v160 = vlaneseq
    %v161 = vshrl.u32 %v160, 7
    %v162 = vsub.s32 3, %v161
    %v163 = vrot.slane %v146, %v162
    %v169 = vunpack.c.l.b16 %v81
    %v170 = vunpack.c.h.b16 %v81
    %v171 = vpack.c.b16 %v169, %v169
    %v172 = vpack.c.b16 %v170, %v170
    %v239 = vunpack.c.l.b16 %v82
    %v240 = vunpack.c.h.b16 %v82
    %v241 = vunpack.c.l.b16 %v83
    %v242 = vunpack.c.h.b16 %v83
    %v243 = vunpack.c.l.b16 %v84
    %v244 = vunpack.c.h.b16 %v84
    %v245 = vunpack.c.l.b16 %v85
    %v246 = vunpack.c.h.b16 %v85
    %v247 = vunpack.c.l.b16 %v86
    %v248 = vunpack.c.h.b16 %v86
    %v249 = vunpack.c.l.b16 %v87
    %v250 = vunpack.c.h.b16 %v87
    %v251 = vunpack.c.l.b16 %v88
    %v252 = vunpack.c.h.b16 %v88
    %v253 = vunpack.c.l.b16 %v89
    %v254 = vunpack.c.h.b16 %v89
    %v255 = vunpack.c.l.b16 %v90
    %v256 = vunpack.c.h.b16 %v90
    %v257 = vunpack.c.l.b16 %v91
    %v258 = vunpack.c.h.b16 %v91
    %v259 = vunpack.c.l.b16 %v92
    %v260 = vunpack.c.h.b16 %v92
    %v261 = vunpack.c.l.b16 %v93
    %v262 = vunpack.c.h.b16 %v93
    %v263 = vunpack.c.l.b16 %v94
    %v264 = vunpack.c.h.b16 %v94
    %v265 = vunpack.c.l.b16 %v95
    %v266 = vunpack.c.h.b16 %v95
    %v267 = vunpack.c.l.b16 %v96
    %v268 = vunpack.c.h.b16 %v96
    %v269 = vunpack.c.l.b16 %v97
    %v270 = vunpack.c.h.b16 %v97
    %v271 = vunpack.c.l.b16 %v98
    %v272 = vunpack.c.h.b16 %v98
    %v273 = vunpack.c.l.b16 %v99
    %v274 = vunpack.c.h.b16 %v99
    %v275 = vunpack.c.l.b16 %v100
    %v276 = vunpack.c.h.b16 %v100
    %v277 = vunpack.c.l.b16 %v101
    %v278 = vunpack.c.h.b16 %v101
    %v279 = vunpack.c.l.b16 %v102
    %v280 = vunpack.c.h.b16 %v102
    %v281 = vunpack.c.l.b16 %v103
    %v282 = vunpack.c.h.b16 %v103
    %v283 = vunpack.c.l.b16 %v104
    %v284 = vunpack.c.h.b16 %v104
    %v285 = vunpack.c.l.b16 %v105
    %v286 = vunpack.c.h.b16 %v105
    %v287 = vunpack.c.l.b16 %v106
    %v288 = vunpack.c.h.b16 %v106
    %v289 = vunpack.c.l.b16 %v107
    %v290 = vunpack.c.h.b16 %v107
    %v291 = vunpack.c.l.b16 %v108
    %v292 = vunpack.c.h.b16 %v108
    %v293 = vunpack.c.l.b16 %v109
    %v294 = vunpack.c.h.b16 %v109
    %v295 = vunpack.c.l.b16 %v110
    %v296 = vunpack.c.h.b16 %v110
    %v297 = vunpack.c.l.b16 %v111
    %v298 = vunpack.c.h.b16 %v111
    %v299 = vunpack.c.l.b16 %v112
    %v300 = vunpack.c.h.b16 %v112
    %v301 = vunpack.c.l.b16 %v113
    %v302 = vunpack.c.h.b16 %v113
    %v303 = vunpack.c.l.b16 %v114
    %v304 = vunpack.c.h.b16 %v114
    %v305 = vunpack.c.l.b16 %v115
    %v306 = vunpack.c.h.b16 %v115
    %v307 = vunpack.c.l.b16 %v116
    %v308 = vunpack.c.h.b16 %v116
    %v309 = vunpack.c.l.b16 %v117
    %v310 = vunpack.c.h.b16 %v117
    %v311 = vunpack.c.l.b16 %v118
    %v312 = vunpack.c.h.b16 %v118
    %v313 = vunpack.c.l.b16 %v119
    %v314 = vunpack.c.h.b16 %v119
    %v315 = vunpack.c.l.b16 %v120
    %v316 = vunpack.c.h.b16 %v120
    %v317 = vunpack.c.l.b16 %v121
    %v318 = vunpack.c.h.b16 %v121
    %v319 = vunpack.c.l.b16 %v122
    %v320 = vunpack.c.h.b16 %v122
    %v321 = vunpack.c.l.b16 %v123
    %v322 = vunpack.c.h.b16 %v123
    %v323 = vunpack.c.l.b16 %v124
    %v324 = vunpack.c.h.b16 %v124
    %v325 = vunpack.c.l.b16 %v125
    %v326 = vunpack.c.h.b16 %v125
    %v327 = vunpack.c.l.b16 %v126
    %v328 = vunpack.c.h.b16 %v126
    %v329 = vunpack.c.l.b16 %v127
    %v330 = vunpack.c.h.b16 %v127
    %v331 = vunpack.c.l.b16 %v128
    %v332 = vunpack.c.h.b16 %v128
    %v333 = vunpack.c.l.b16 %v129
    %v334 = vunpack.c.h.b16 %v129
    %v335 = vunpack.c.l.b16 %v130
    %v336 = vunpack.c.h.b16 %v130
    %v337 = vunpack.c.l.b16 %v131
    %v338 = vunpack.c.h.b16 %v131
    %v339 = vunpack.c.l.b16 %v132
    %v340 = vunpack.c.h.b16 %v132
    %v341 = vunpack.c.l.b16 %v133
    %v342 = vunpack.c.h.b16 %v133
    %v343 = vunpack.c.l.b16 %v134
    %v344 = vunpack.c.h.b16 %v134
    %v345 = vunpack.c.l.b16 %v135
    %v346 = vunpack.c.h.b16 %v135
    %v347 = vunpack.c.l.b16 %v136
    %v348 = vunpack.c.h.b16 %v136
    %v349 = vunpack.c.l.b16 %v137
    %v350 = vunpack.c.h.b16 %v137
    %v351 = vunpack.c.l.b16 %v138
    %v352 = vunpack.c.h.b16 %v138
    %v353 = vunpack.c.l.b16 %v139
    %v354 = vunpack.c.h.b16 %v139
    %v355 = vunpack.c.l.b16 %v140
    %v356 = vunpack.c.h.b16 %v140
    %v357 = vunpack.c.l.b16 %v141
    %v358 = vunpack.c.h.b16 %v141
    %v359 = vunpack.c.l.b16 %v142
    %v360 = vunpack.c.h.b16 %v142
    %v361 = vunpack.c.l.b16 %v143
    %v362 = vunpack.c.h.b16 %v143
    %v363 = vunpack.c.l.b16 %v144
    %v364 = vunpack.c.h.b16 %v144
    %v365 = vunpack.c.l.b16 %v145
    %v366 = vunpack.c.h.b16 %v145
    %v367 = vpack.c.b16 %v243, %v239
    %v368 = vpack.c.b16 %v244, %v240
    %v369 = vpack.c.b16 %v245, %v241
    %v370 = vpack.c.b16 %v246, %v242
    %v371 = vpack.c.b16 %v251, %v247
    %v372 = vpack.c.b16 %v252, %v248
    %v373 = vpack.c.b16 %v253, %v249
    %v374 = vpack.c.b16 %v254, %v250
    %v375 = vpack.c.b16 %v259, %v255
    %v376 = vpack.c.b16 %v260, %v256
    %v377 = vpack.c.b16 %v261, %v257
    %v378 = vpack.c.b16 %v262, %v258
    %v379 = vpack.c.b16 %v267, %v263
    %v380 = vpack.c.b16 %v268, %v264
    %v381 = vpack.c.b16 %v269, %v265
    %v382 = vpack.c.b16 %v270, %v266
    %v383 = vpack.c.b16 %v275, %v271
    %v384 = vpack.c.b16 %v276, %v272
    %v385 = vpack.c.b16 %v277, %v273
    %v386 = vpack.c.b16 %v278, %v274
    %v387 = vpack.c.b16 %v283, %v279
    %v388 = vpack.c.b16 %v284, %v280
    %v389 = vpack.c.b16 %v285, %v281
    %v390 = vpack.c.b16 %v286, %v282
    %v391 = vpack.c.b16 %v291, %v287
    %v392 = vpack.c.b16 %v292, %v288
    %v393 = vpack.c.b16 %v293, %v289
    %v394 = vpack.c.b16 %v294, %v290
    %v395 = vpack.c.b16 %v299, %v295
    %v396 = vpack.c.b16 %v300, %v296
    %v397 = vpack.c.b16 %v301, %v297
    %v398 = vpack.c.b16 %v302, %v298
    %v399 = vpack.c.b16 %v307, %v303
    %v400 = vpack.c.b16 %v308, %v304
    %v401 = vpack.c.b16 %v309, %v305
    %v402 = vpack.c.b16 %v310, %v306
    %v403 = vpack.c.b16 %v315, %v311
    %v404 = vpack.c.b16 %v316, %v312
    %v405 = vpack.c.b16 %v317, %v313
    %v406 = vpack.c.b16 %v318, %v314
    %v407 = vpack.c.b16 %v323, %v319
    %v408 = vpack.c.b16 %v324, %v320
    %v409 = vpack.c.b16 %v325, %v321
    %v410 = vpack.c.b16 %v326, %v322
    %v411 = vpack.c.b16 %v331, %v327
    %v412 = vpack.c.b16 %v332, %v328
    %v413 = vpack.c.b16 %v333, %v329
    %v414 = vpack.c.b16 %v334, %v330
    %v415 = vpack.c.b16 %v339, %v335
    %v416 = vpack.c.b16 %v340, %v336
    %v417 = vpack.c.b16 %v341, %v337
    %v418 = vpack.c.b16 %v342, %v338
    %v419 = vpack.c.b16 %v347, %v343
    %v420 = vpack.c.b16 %v348, %v344
    %v421 = vpack.c.b16 %v349, %v345
    %v422 = vpack.c.b16 %v350, %v346
    %v423 = vpack.c.b16 %v355, %v351
    %v424 = vpack.c.b16 %v356, %v352
    %v425 = vpack.c.b16 %v357, %v353
    %v426 = vpack.c.b16 %v358, %v354
    %v427 = vpack.c.b16 %v363, %v359
    %v428 = vpack.c.b16 %v364, %v360
    %v429 = vpack.c.b16 %v365, %v361
    %v430 = vpack.c.b16 %v366, %v362
    %495 = vmatprep.subr.bf16.mxu0 %v368
    %496 = vmatpush1.bf16.msra.mxu0 %v367
    %497 = vmatprep.subr.bf16.mxu0 %v372
    %498 = vmatpush1.bf16.msra.mxu0 %v371
    %499 = vmatprep.subr.bf16.mxu0 %v376
    %500 = vmatpush1.bf16.msra.mxu0 %v375
    %501 = vmatprep.subr.bf16.mxu0 %v380
    %502 = vmatpush1.bf16.msra.mxu0 %v379
    %503 = vmatprep.subr.bf16.mxu0 %v384
    %504 = vmatpush1.bf16.msra.mxu0 %v383
    %505 = vmatprep.subr.bf16.mxu0 %v388
    %506 = vmatpush1.bf16.msra.mxu0 %v387
    %507 = vmatprep.subr.bf16.mxu0 %v392
    %508 = vmatpush1.bf16.msra.mxu0 %v391
    %509 = vmatprep.subr.bf16.mxu0 %v396
    %510 = vmatpush1.bf16.msra.mxu0 %v395
    %511 = vmatprep.subr.bf16.mxu0 %v400
    %512 = vmatpush1.bf16.msra.mxu0 %v399
    %513 = vmatprep.subr.bf16.mxu0 %v404
    %514 = vmatpush1.bf16.msra.mxu0 %v403
    %515 = vmatprep.subr.bf16.mxu0 %v408
    %516 = vmatpush1.bf16.msra.mxu0 %v407
    %517 = vmatprep.subr.bf16.mxu0 %v412
    %518 = vmatpush1.bf16.msra.mxu0 %v411
    %519 = vmatprep.subr.bf16.mxu0 %v416
    %520 = vmatpush1.bf16.msra.mxu0 %v415
    %521 = vmatprep.subr.bf16.mxu0 %v420
    %522 = vmatpush1.bf16.msra.mxu0 %v419
    %523 = vmatprep.subr.bf16.mxu0 %v424
    %524 = vmatpush1.bf16.msra.mxu0 %v423
    %525 = vmatprep.subr.bf16.mxu0 %v428
    %526 = vmatpush1.bf16.msra.mxu0 %v427
    %527 = vmatprep.mubr.bf16.mxu0 %v172
    %528 = vmatmul.mubr.bf16.gmra.mrb[0].mxu0 %v171
    %v529 = vpop.f32.mrb[0].mxu0
    %v530 = vadd.f32 %v151, %v529
    %v531 = vpop.f32.mrb[0].mxu0
    %v532 = vadd.f32 %v155, %v531
    %v533 = vpop.f32.mrb[0].mxu0
    %v534 = vpop.f32.mrb[0].mxu0
    %535 = vdwg.mxu0
    %536 = vmatprep.subr.bf16.mxu0 %v370
    %537 = vmatpush1.bf16.msra.mxu0 %v369
    %538 = vmatprep.subr.bf16.mxu0 %v374
    %539 = vmatpush1.bf16.msra.mxu0 %v373
    %540 = vmatprep.subr.bf16.mxu0 %v378
    %541 = vmatpush1.bf16.msra.mxu0 %v377
    %542 = vmatprep.subr.bf16.mxu0 %v382
    %543 = vmatpush1.bf16.msra.mxu0 %v381
    %544 = vmatprep.subr.bf16.mxu0 %v386
    %545 = vmatpush1.bf16.msra.mxu0 %v385
    %546 = vmatprep.subr.bf16.mxu0 %v390
    %547 = vmatpush1.bf16.msra.mxu0 %v389
    %548 = vmatprep.subr.bf16.mxu0 %v394
    %549 = vmatpush1.bf16.msra.mxu0 %v393
    %550 = vmatprep.subr.bf16.mxu0 %v398
    %551 = vmatpush1.bf16.msra.mxu0 %v397
    %552 = vmatprep.subr.bf16.mxu0 %v402
    %553 = vmatpush1.bf16.msra.mxu0 %v401
    %554 = vmatprep.subr.bf16.mxu0 %v406
    %555 = vmatpush1.bf16.msra.mxu0 %v405
    %556 = vmatprep.subr.bf16.mxu0 %v410
    %557 = vmatpush1.bf16.msra.mxu0 %v409
    %558 = vmatprep.subr.bf16.mxu0 %v414
    %559 = vmatpush1.bf16.msra.mxu0 %v413
    %560 = vmatprep.subr.bf16.mxu0 %v418
    %561 = vmatpush1.bf16.msra.mxu0 %v417
    %562 = vmatprep.subr.bf16.mxu0 %v422
    %563 = vmatpush1.bf16.msra.mxu0 %v421
    %564 = vmatprep.subr.bf16.mxu0 %v426
    %565 = vmatpush1.bf16.msra.mxu0 %v425
    %566 = vmatprep.subr.bf16.mxu0 %v430
    %567 = vmatpush1.bf16.msra.mxu0 %v429
    %568 = vmatprep.mubr.bf16.mxu0 %v172
    %569 = vmatmul.mubr.bf16.gmra.mrb[0].mxu0 %v171
    %v570 = vpop.f32.mrb[0].mxu0
    %v571 = vadd.f32 %v159, %v570
    %v572 = vpop.f32.mrb[0].mxu0
    %v573 = vadd.f32 %v163, %v572
    %v574 = vpop.f32.mrb[0].mxu0
    %v575 = vpop.f32.mrb[0].mxu0
    %576 = vdwg.mxu0
    %v577 = vmax.f32 %v530, 0.0
    %v578 = vmax.f32 %v532, 0.0
    %v579 = vmax.f32 %v571, 0.0
    %v580 = vmax.f32 %v573, 0.0
    %v581 = vpack.c.bf16 %v577, %v577
    %v582 = vpack.c.bf16 %v578, %v578
    %v583 = vpack.c.bf16 %v579, %v579
    %v584 = vpack.c.bf16 %v580, %v580
    %v585 = vld [vmem:[#allocation7] sm:$0xff]
    %v586 = vld [vmem:[#allocation7 + $0x8] sm:$0xff]
    %v587 = vld [vmem:[#allocation7 + $0x10] sm:$0xff]
    %v588 = vld [vmem:[#allocation7 + $0x18] sm:$0xff]
    %v589 = vld [vmem:[#allocation7 + $0x20] sm:$0xff]
    %v590 = vld [vmem:[#allocation7 + $0x28] sm:$0xff]
    %v591 = vld [vmem:[#allocation7 + $0x30] sm:$0xff]
    %v592 = vld [vmem:[#allocation7 + $0x38] sm:$0xff]
    %v593 = vld [vmem:[#allocation7 + $0x40] sm:$0xff]
    %v594 = vld [vmem:[#allocation7 + $0x48] sm:$0xff]
    %v595 = vld [vmem:[#allocation7 + $0x50] sm:$0xff]
    %v596 = vld [vmem:[#allocation7 + $0x58] sm:$0xff]
    %v597 = vld [vmem:[#allocation7 + $0x60] sm:$0xff]
    %v598 = vld [vmem:[#allocation7 + $0x68] sm:$0xff]
    %v599 = vld [vmem:[#allocation7 + $0x70] sm:$0xff]
    %v600 = vld [vmem:[#allocation7 + $0x78] sm:$0xff]
    %v601 = vld [vmem:[#allocation7 + $0x80] sm:$0xff]
    %v602 = vld [vmem:[#allocation7 + $0x88] sm:$0xff]
    %v603 = vld [vmem:[#allocation7 + $0x90] sm:$0xff]
    %v604 = vld [vmem:[#allocation7 + $0x98] sm:$0xff]
    %v605 = vld [vmem:[#allocation7 + $0xa0] sm:$0xff]
    %v606 = vld [vmem:[#allocation7 + $0xa8] sm:$0xff]
    %v607 = vld [vmem:[#allocation7 + $0xb0] sm:$0xff]
    %v608 = vld [vmem:[#allocation7 + $0xb8] sm:$0xff]
    %v609 = vld [vmem:[#allocation7 + $0xc0] sm:$0xff]
    %v610 = vld [vmem:[#allocation7 + $0xc8] sm:$0xff]
    %v611 = vld [vmem:[#allocation7 + $0xd0] sm:$0xff]
    %v612 = vld [vmem:[#allocation7 + $0xd8] sm:$0xff]
    %v613 = vld [vmem:[#allocation7 + $0xe0] sm:$0xff]
    %v614 = vld [vmem:[#allocation7 + $0xe8] sm:$0xff]
    %v615 = vld [vmem:[#allocation7 + $0xf0] sm:$0xff]
    %v616 = vld [vmem:[#allocation7 + $0xf8] sm:$0xff]
    %v617 = vld [vmem:[#allocation7 + $0x100] sm:$0xff]
    %v618 = vld [vmem:[#allocation7 + $0x108] sm:$0xff]
    %v619 = vld [vmem:[#allocation7 + $0x110] sm:$0xff]
    %v620 = vld [vmem:[#allocation7 + $0x118] sm:$0xff]
    %v621 = vld [vmem:[#allocation7 + $0x120] sm:$0xff]
    %v622 = vld [vmem:[#allocation7 + $0x128] sm:$0xff]
    %v623 = vld [vmem:[#allocation7 + $0x130] sm:$0xff]
    %v624 = vld [vmem:[#allocation7 + $0x138] sm:$0xff]
    %v625 = vld [vmem:[#allocation7 + $0x140] sm:$0xff]
    %v626 = vld [vmem:[#allocation7 + $0x148] sm:$0xff]
    %v627 = vld [vmem:[#allocation7 + $0x150] sm:$0xff]
    %v628 = vld [vmem:[#allocation7 + $0x158] sm:$0xff]
    %v629 = vld [vmem:[#allocation7 + $0x160] sm:$0xff]
    %v630 = vld [vmem:[#allocation7 + $0x168] sm:$0xff]
    %v631 = vld [vmem:[#allocation7 + $0x170] sm:$0xff]
    %v632 = vld [vmem:[#allocation7 + $0x178] sm:$0xff]
    %v633 = vld [vmem:[#allocation7 + $0x180] sm:$0xff]
    %v634 = vld [vmem:[#allocation7 + $0x188] sm:$0xff]
    %v635 = vld [vmem:[#allocation7 + $0x190] sm:$0xff]
    %v636 = vld [vmem:[#allocation7 + $0x198] sm:$0xff]
    %v637 = vld [vmem:[#allocation7 + $0x1a0] sm:$0xff]
    %v638 = vld [vmem:[#allocation7 + $0x1a8] sm:$0xff]
    %v639 = vld [vmem:[#allocation7 + $0x1b0] sm:$0xff]
    %v640 = vld [vmem:[#allocation7 + $0x1b8] sm:$0xff]
    %v641 = vld [vmem:[#allocation7 + $0x1c0] sm:$0xff]
    %v642 = vld [vmem:[#allocation7 + $0x1c8] sm:$0xff]
    %v643 = vld [vmem:[#allocation7 + $0x1d0] sm:$0xff]
    %v644 = vld [vmem:[#allocation7 + $0x1d8] sm:$0xff]
    %v645 = vld [vmem:[#allocation7 + $0x1e0] sm:$0xff]
    %v646 = vld [vmem:[#allocation7 + $0x1e8] sm:$0xff]
    %v647 = vld [vmem:[#allocation7 + $0x1f0] sm:$0xff]
    %v648 = vld [vmem:[#allocation7 + $0x1f8] sm:$0xff]
    %v649 = vld [vmem:[%s4] sm:$0x3]
    %v651 = vlaneseq
    %v652 = vshrl.u32 %v651, 7
    %v653 = vsub.s32 0, %v652
    %v654 = vrot.slane %v649, %v653
    %v655 = vlaneseq
    %v656 = vshrl.u32 %v655, 7
    %v657 = vsub.s32 1, %v656
    %v658 = vrot.slane %v649, %v657
    %v725 = vunpack.c.l.b16 %v585
    %v726 = vunpack.c.h.b16 %v585
    %v727 = vunpack.c.l.b16 %v586
    %v728 = vunpack.c.h.b16 %v586
    %v729 = vunpack.c.l.b16 %v587
    %v730 = vunpack.c.h.b16 %v587
    %v731 = vunpack.c.l.b16 %v588
    %v732 = vunpack.c.h.b16 %v588
    %v733 = vunpack.c.l.b16 %v589
    %v734 = vunpack.c.h.b16 %v589
    %v735 = vunpack.c.l.b16 %v590
    %v736 = vunpack.c.h.b16 %v590
    %v737 = vunpack.c.l.b16 %v591
    %v738 = vunpack.c.h.b16 %v591
    %v739 = vunpack.c.l.b16 %v592
    %v740 = vunpack.c.h.b16 %v592
    %v741 = vunpack.c.l.b16 %v593
    %v742 = vunpack.c.h.b16 %v593
    %v743 = vunpack.c.l.b16 %v594
    %v744 = vunpack.c.h.b16 %v594
    %v745 = vunpack.c.l.b16 %v595
    %v746 = vunpack.c.h.b16 %v595
    %v747 = vunpack.c.l.b16 %v596
    %v748 = vunpack.c.h.b16 %v596
    %v749 = vunpack.c.l.b16 %v597
    %v750 = vunpack.c.h.b16 %v597
    %v751 = vunpack.c.l.b16 %v598
    %v752 = vunpack.c.h.b16 %v598
    %v753 = vunpack.c.l.b16 %v599
    %v754 = vunpack.c.h.b16 %v599
    %v755 = vunpack.c.l.b16 %v600
    %v756 = vunpack.c.h.b16 %v600
    %v757 = vunpack.c.l.b16 %v601
    %v758 = vunpack.c.h.b16 %v601
    %v759 = vunpack.c.l.b16 %v602
    %v760 = vunpack.c.h.b16 %v602
    %v761 = vunpack.c.l.b16 %v603
    %v762 = vunpack.c.h.b16 %v603
    %v763 = vunpack.c.l.b16 %v604
    %v764 = vunpack.c.h.b16 %v604
    %v765 = vunpack.c.l.b16 %v605
    %v766 = vunpack.c.h.b16 %v605
    %v767 = vunpack.c.l.b16 %v606
    %v768 = vunpack.c.h.b16 %v606
    %v769 = vunpack.c.l.b16 %v607
    %v770 = vunpack.c.h.b16 %v607
    %v771 = vunpack.c.l.b16 %v608
    %v772 = vunpack.c.h.b16 %v608
    %v773 = vunpack.c.l.b16 %v609
    %v774 = vunpack.c.h.b16 %v609
    %v775 = vunpack.c.l.b16 %v610
    %v776 = vunpack.c.h.b16 %v610
    %v777 = vunpack.c.l.b16 %v611
    %v778 = vunpack.c.h.b16 %v611
    %v779 = vunpack.c.l.b16 %v612
    %v780 = vunpack.c.h.b16 %v612
    %v781 = vunpack.c.l.b16 %v613
    %v782 = vunpack.c.h.b16 %v613
    %v783 = vunpack.c.l.b16 %v614
    %v784 = vunpack.c.h.b16 %v614
    %v785 = vunpack.c.l.b16 %v615
    %v786 = vunpack.c.h.b16 %v615
    %v787 = vunpack.c.l.b16 %v616
    %v788 = vunpack.c.h.b16 %v616
    %v789 = vunpack.c.l.b16 %v617
    %v790 = vunpack.c.h.b16 %v617
    %v791 = vunpack.c.l.b16 %v618
    %v792 = vunpack.c.h.b16 %v618
    %v793 = vunpack.c.l.b16 %v619
    %v794 = vunpack.c.h.b16 %v619
    %v795 = vunpack.c.l.b16 %v620
    %v796 = vunpack.c.h.b16 %v620
    %v797 = vunpack.c.l.b16 %v621
    %v798 = vunpack.c.h.b16 %v621
    %v799 = vunpack.c.l.b16 %v622
    %v800 = vunpack.c.h.b16 %v622
    %v801 = vunpack.c.l.b16 %v623
    %v802 = vunpack.c.h.b16 %v623
    %v803 = vunpack.c.l.b16 %v624
    %v804 = vunpack.c.h.b16 %v624
    %v805 = vunpack.c.l.b16 %v625
    %v806 = vunpack.c.h.b16 %v625
    %v807 = vunpack.c.l.b16 %v626
    %v808 = vunpack.c.h.b16 %v626
    %v809 = vunpack.c.l.b16 %v627
    %v810 = vunpack.c.h.b16 %v627
    %v811 = vunpack.c.l.b16 %v628
    %v812 = vunpack.c.h.b16 %v628
    %v813 = vunpack.c.l.b16 %v629
    %v814 = vunpack.c.h.b16 %v629
    %v815 = vunpack.c.l.b16 %v630
    %v816 = vunpack.c.h.b16 %v630
    %v817 = vunpack.c.l.b16 %v631
    %v818 = vunpack.c.h.b16 %v631
    %v819 = vunpack.c.l.b16 %v632
    %v820 = vunpack.c.h.b16 %v632
    %v821 = vunpack.c.l.b16 %v633
    %v822 = vunpack.c.h.b16 %v633
    %v823 = vunpack.c.l.b16 %v634
    %v824 = vunpack.c.h.b16 %v634
    %v825 = vunpack.c.l.b16 %v635
    %v826 = vunpack.c.h.b16 %v635
    %v827 = vunpack.c.l.b16 %v636
    %v828 = vunpack.c.h.b16 %v636
    %v829 = vunpack.c.l.b16 %v637
    %v830 = vunpack.c.h.b16 %v637
    %v831 = vunpack.c.l.b16 %v638
    %v832 = vunpack.c.h.b16 %v638
    %v833 = vunpack.c.l.b16 %v639
    %v834 = vunpack.c.h.b16 %v639
    %v835 = vunpack.c.l.b16 %v640
    %v836 = vunpack.c.h.b16 %v640
    %v837 = vunpack.c.l.b16 %v641
    %v838 = vunpack.c.h.b16 %v641
    %v839 = vunpack.c.l.b16 %v642
    %v840 = vunpack.c.h.b16 %v642
    %v841 = vunpack.c.l.b16 %v643
    %v842 = vunpack.c.h.b16 %v643
    %v843 = vunpack.c.l.b16 %v644
    %v844 = vunpack.c.h.b16 %v644
    %v845 = vunpack.c.l.b16 %v645
    %v846 = vunpack.c.h.b16 %v645
    %v847 = vunpack.c.l.b16 %v646
    %v848 = vunpack.c.h.b16 %v646
    %v849 = vunpack.c.l.b16 %v647
    %v850 = vunpack.c.h.b16 %v647
    %v851 = vunpack.c.l.b16 %v648
    %v852 = vunpack.c.h.b16 %v648
    %v853 = vpack.c.b16 %v727, %v725
    %v854 = vpack.c.b16 %v728, %v726
    %v855 = vpack.c.b16 %v731, %v729
    %v856 = vpack.c.b16 %v732, %v730
    %v857 = vpack.c.b16 %v735, %v733
    %v858 = vpack.c.b16 %v736, %v734
    %v859 = vpack.c.b16 %v739, %v737
    %v860 = vpack.c.b16 %v740, %v738
    %v861 = vpack.c.b16 %v743, %v741
    %v862 = vpack.c.b16 %v744, %v742
    %v863 = vpack.c.b16 %v747, %v745
    %v864 = vpack.c.b16 %v748, %v746
    %v865 = vpack.c.b16 %v751, %v749
    %v866 = vpack.c.b16 %v752, %v750
    %v867 = vpack.c.b16 %v755, %v753
    %v868 = vpack.c.b16 %v756, %v754
    %v869 = vpack.c.b16 %v759, %v757
    %v870 = vpack.c.b16 %v760, %v758
    %v871 = vpack.c.b16 %v763, %v761
    %v872 = vpack.c.b16 %v764, %v762
    %v873 = vpack.c.b16 %v767, %v765
    %v874 = vpack.c.b16 %v768, %v766
    %v875 = vpack.c.b16 %v771, %v769
    %v876 = vpack.c.b16 %v772, %v770
    %v877 = vpack.c.b16 %v775, %v773
    %v878 = vpack.c.b16 %v776, %v774
    %v879 = vpack.c.b16 %v779, %v777
    %v880 = vpack.c.b16 %v780, %v778
    %v881 = vpack.c.b16 %v783, %v781
    %v882 = vpack.c.b16 %v784, %v782
    %v883 = vpack.c.b16 %v787, %v785
    %v884 = vpack.c.b16 %v788, %v786
    %v885 = vpack.c.b16 %v791, %v789
    %v886 = vpack.c.b16 %v792, %v790
    %v887 = vpack.c.b16 %v795, %v793
    %v888 = vpack.c.b16 %v796, %v794
    %v889 = vpack.c.b16 %v799, %v797
    %v890 = vpack.c.b16 %v800, %v798
    %v891 = vpack.c.b16 %v803, %v801
    %v892 = vpack.c.b16 %v804, %v802
    %v893 = vpack.c.b16 %v807, %v805
    %v894 = vpack.c.b16 %v808, %v806
    %v895 = vpack.c.b16 %v811, %v809
    %v896 = vpack.c.b16 %v812, %v810
    %v897 = vpack.c.b16 %v815, %v813
    %v898 = vpack.c.b16 %v816, %v814
    %v899 = vpack.c.b16 %v819, %v817
    %v900 = vpack.c.b16 %v820, %v818
    %v901 = vpack.c.b16 %v823, %v821
    %v902 = vpack.c.b16 %v824, %v822
    %v903 = vpack.c.b16 %v827, %v825
    %v904 = vpack.c.b16 %v828, %v826
    %v905 = vpack.c.b16 %v831, %v829
    %v906 = vpack.c.b16 %v832, %v830
    %v907 = vpack.c.b16 %v835, %v833
    %v908 = vpack.c.b16 %v836, %v834
    %v909 = vpack.c.b16 %v839, %v837
    %v910 = vpack.c.b16 %v840, %v838
    %v911 = vpack.c.b16 %v843, %v841
    %v912 = vpack.c.b16 %v844, %v842
    %v913 = vpack.c.b16 %v847, %v845
    %v914 = vpack.c.b16 %v848, %v846
    %v915 = vpack.c.b16 %v851, %v849
    %v916 = vpack.c.b16 %v852, %v850
    %981 = vmatprep.subr.bf16.mxu0 %v854
    %982 = vmatpush1.bf16.msra.mxu0 %v853
    %983 = vmatprep.subr.bf16.mxu0 %v856
    %984 = vmatpush1.bf16.msra.mxu0 %v855
    %985 = vmatprep.subr.bf16.mxu0 %v858
    %986 = vmatpush1.bf16.msra.mxu0 %v857
    %987 = vmatprep.subr.bf16.mxu0 %v860
    %988 = vmatpush1.bf16.msra.mxu0 %v859
    %989 = vmatprep.subr.bf16.mxu0 %v862
    %990 = vmatpush1.bf16.msra.mxu0 %v861
    %991 = vmatprep.subr.bf16.mxu0 %v864
    %992 = vmatpush1.bf16.msra.mxu0 %v863
    %993 = vmatprep.subr.bf16.mxu0 %v866
    %994 = vmatpush1.bf16.msra.mxu0 %v865
    %995 = vmatprep.subr.bf16.mxu0 %v868
    %996 = vmatpush1.bf16.msra.mxu0 %v867
    %997 = vmatprep.subr.bf16.mxu0 %v870
    %998 = vmatpush1.bf16.msra.mxu0 %v869
    %999 = vmatprep.subr.bf16.mxu0 %v872
    %1000 = vmatpush1.bf16.msra.mxu0 %v871
    %1001 = vmatprep.subr.bf16.mxu0 %v874
    %1002 = vmatpush1.bf16.msra.mxu0 %v873
    %1003 = vmatprep.subr.bf16.mxu0 %v876
    %1004 = vmatpush1.bf16.msra.mxu0 %v875
    %1005 = vmatprep.subr.bf16.mxu0 %v878
    %1006 = vmatpush1.bf16.msra.mxu0 %v877
    %1007 = vmatprep.subr.bf16.mxu0 %v880
    %1008 = vmatpush1.bf16.msra.mxu0 %v879
    %1009 = vmatprep.subr.bf16.mxu0 %v882
    %1010 = vmatpush1.bf16.msra.mxu0 %v881
    %1011 = vmatprep.subr.bf16.mxu0 %v884
    %1012 = vmatpush1.bf16.msra.mxu0 %v883
    %1013 = vmatprep.mubr.bf16.mxu0 %v582
    %1014 = vmatmul.mubr.bf16.gmra.mrb[0].mxu0 %v581
    %v1015 = vpop.f32.mrb[0].mxu0
    %v1016 = vadd.f32 %v654, %v1015
    %v1017 = vpop.f32.mrb[0].mxu0
    %v1018 = vadd.f32 %v658, %v1017
    %v1019 = vpop.f32.mrb[0].mxu0
    %v1020 = vpop.f32.mrb[0].mxu0
    %1021 = vdwg.mxu0
    %1022 = vmatprep.subr.bf16.mxu0 %v886
    %1023 = vmatpush1.bf16.msra.mxu0 %v885
    %1024 = vmatprep.subr.bf16.mxu0 %v888
    %1025 = vmatpush1.bf16.msra.mxu0 %v887
    %1026 = vmatprep.subr.bf16.mxu0 %v890
    %1027 = vmatpush1.bf16.msra.mxu0 %v889
    %1028 = vmatprep.subr.bf16.mxu0 %v892
    %1029 = vmatpush1.bf16.msra.mxu0 %v891
    %1030 = vmatprep.subr.bf16.mxu0 %v894
    %1031 = vmatpush1.bf16.msra.mxu0 %v893
    %1032 = vmatprep.subr.bf16.mxu0 %v896
    %1033 = vmatpush1.bf16.msra.mxu0 %v895
    %1034 = vmatprep.subr.bf16.mxu0 %v898
    %1035 = vmatpush1.bf16.msra.mxu0 %v897
    %1036 = vmatprep.subr.bf16.mxu0 %v900
    %1037 = vmatpush1.bf16.msra.mxu0 %v899
    %1038 = vmatprep.subr.bf16.mxu0 %v902
    %1039 = vmatpush1.bf16.msra.mxu0 %v901
    %1040 = vmatprep.subr.bf16.mxu0 %v904
    %1041 = vmatpush1.bf16.msra.mxu0 %v903
    %1042 = vmatprep.subr.bf16.mxu0 %v906
    %1043 = vmatpush1.bf16.msra.mxu0 %v905
    %1044 = vmatprep.subr.bf16.mxu0 %v908
    %1045 = vmatpush1.bf16.msra.mxu0 %v907
    %1046 = vmatprep.subr.bf16.mxu0 %v910
    %1047 = vmatpush1.bf16.msra.mxu0 %v909
    %1048 = vmatprep.subr.bf16.mxu0 %v912
    %1049 = vmatpush1.bf16.msra.mxu0 %v911
    %1050 = vmatprep.subr.bf16.mxu0 %v914
    %1051 = vmatpush1.bf16.msra.mxu0 %v913
    %1052 = vmatprep.subr.bf16.mxu0 %v916
    %1053 = vmatpush1.bf16.msra.mxu0 %v915
    %1054 = vmatprep.mubr.bf16.mxu0 %v584
    %1055 = vmatmul.mubr.bf16.gmra.mrb[0].mxu0 %v583
    %v1056 = vpop.f32.mrb[0].mxu0
    %v1057 = vadd.f32 %v1016, %v1056
    %v1058 = vpop.f32.mrb[0].mxu0
    %v1059 = vadd.f32 %v1018, %v1058
    %v1060 = vpop.f32.mrb[0].mxu0
    %v1061 = vpop.f32.mrb[0].mxu0
    %1062 = vdwg.mxu0
    %v1063 = vmax.f32 %v1057, 0.0
    %v1064 = vmax.f32 %v1059, 0.0
    %v1065 = vpack.c.bf16 %v1063, %v1063
    %v1066 = vpack.c.bf16 %v1064, %v1064
    %v1067 = vld [vmem:[#allocation8] sm:$0xf]
    %v1068 = vld [vmem:[#allocation8 + $0x4] sm:$0xf]
    %v1069 = vld [vmem:[#allocation8 + $0x8] sm:$0xf]
    %v1070 = vld [vmem:[#allocation8 + $0xc] sm:$0xf]
    %v1071 = vld [vmem:[#allocation8 + $0x10] sm:$0xf]
    %v1072 = vld [vmem:[#allocation8 + $0x14] sm:$0xf]
    %v1073 = vld [vmem:[#allocation8 + $0x18] sm:$0xf]
    %v1074 = vld [vmem:[#allocation8 + $0x1c] sm:$0xf]
    %v1075 = vld [vmem:[#allocation8 + $0x20] sm:$0xf]
    %v1076 = vld [vmem:[#allocation8 + $0x24] sm:$0xf]
    %v1077 = vld [vmem:[#allocation8 + $0x28] sm:$0xf]
    %v1078 = vld [vmem:[#allocation8 + $0x2c] sm:$0xf]
    %v1079 = vld [vmem:[#allocation8 + $0x30] sm:$0xf]
    %v1080 = vld [vmem:[#allocation8 + $0x34] sm:$0xf]
    %v1081 = vld [vmem:[#allocation8 + $0x38] sm:$0xf]
    %v1082 = vld [vmem:[#allocation8 + $0x3c] sm:$0xf]
    %v1083 = vld [vmem:[#allocation8 + $0x40] sm:$0xf]
    %v1084 = vld [vmem:[#allocation8 + $0x44] sm:$0xf]
    %v1085 = vld [vmem:[#allocation8 + $0x48] sm:$0xf]
    %v1086 = vld [vmem:[#allocation8 + $0x4c] sm:$0xf]
    %v1087 = vld [vmem:[#allocation8 + $0x50] sm:$0xf]
    %v1088 = vld [vmem:[#allocation8 + $0x54] sm:$0xf]
    %v1089 = vld [vmem:[#allocation8 + $0x58] sm:$0xf]
    %v1090 = vld [vmem:[#allocation8 + $0x5c] sm:$0xf]
    %v1091 = vld [vmem:[#allocation8 + $0x60] sm:$0xf]
    %v1092 = vld [vmem:[#allocation8 + $0x64] sm:$0xf]
    %v1093 = vld [vmem:[#allocation8 + $0x68] sm:$0xf]
    %v1094 = vld [vmem:[#allocation8 + $0x6c] sm:$0xf]
    %v1095 = vld [vmem:[#allocation8 + $0x70] sm:$0xf]
    %v1096 = vld [vmem:[#allocation8 + $0x74] sm:$0xf]
    %v1097 = vld [vmem:[#allocation8 + $0x78] sm:$0xf]
    %v1098 = vld [vmem:[#allocation8 + $0x7c] sm:$0xf]
    %v1099 = vld [vmem:[%s6] sm:$0x1]
    %v1101 = vlaneseq
    %v1102 = vshrl.u32 %v1101, 7
    %v1103 = vsub.s32 0, %v1102
    %v1104 = vrot.slane %v1099, %v1103
    %v1138 = vunpack.c.l.b16 %v1067
    %v1139 = vunpack.c.l.b16 %v1068
    %v1140 = vunpack.c.l.b16 %v1069
    %v1141 = vunpack.c.l.b16 %v1070
    %v1142 = vunpack.c.l.b16 %v1071
    %v1143 = vunpack.c.l.b16 %v1072
    %v1144 = vunpack.c.l.b16 %v1073
    %v1145 = vunpack.c.l.b16 %v1074
    %v1146 = vunpack.c.l.b16 %v1075
    %v1147 = vunpack.c.l.b16 %v1076
    %v1148 = vunpack.c.l.b16 %v1077
    %v1149 = vunpack.c.l.b16 %v1078
    %v1150 = vunpack.c.l.b16 %v1079
    %v1151 = vunpack.c.l.b16 %v1080
    %v1152 = vunpack.c.l.b16 %v1081
    %v1153 = vunpack.c.l.b16 %v1082
    %v1154 = vunpack.c.l.b16 %v1083
    %v1155 = vunpack.c.l.b16 %v1084
    %v1156 = vunpack.c.l.b16 %v1085
    %v1157 = vunpack.c.l.b16 %v1086
    %v1158 = vunpack.c.l.b16 %v1087
    %v1159 = vunpack.c.l.b16 %v1088
    %v1160 = vunpack.c.l.b16 %v1089
    %v1161 = vunpack.c.l.b16 %v1090
    %v1162 = vunpack.c.l.b16 %v1091
    %v1163 = vunpack.c.l.b16 %v1092
    %v1164 = vunpack.c.l.b16 %v1093
    %v1165 = vunpack.c.l.b16 %v1094
    %v1166 = vunpack.c.l.b16 %v1095
    %v1167 = vunpack.c.l.b16 %v1096
    %v1168 = vunpack.c.l.b16 %v1097
    %v1169 = vunpack.c.l.b16 %v1098
    %v1170 = vpack.c.b16 %v1139, %v1138
    %v1171 = vpack.c.b16 %v1141, %v1140
    %v1172 = vpack.c.b16 %v1143, %v1142
    %v1173 = vpack.c.b16 %v1145, %v1144
    %v1174 = vpack.c.b16 %v1147, %v1146
    %v1175 = vpack.c.b16 %v1149, %v1148
    %v1176 = vpack.c.b16 %v1151, %v1150
    %v1177 = vpack.c.b16 %v1153, %v1152
    %v1178 = vpack.c.b16 %v1155, %v1154
    %v1179 = vpack.c.b16 %v1157, %v1156
    %v1180 = vpack.c.b16 %v1159, %v1158
    %v1181 = vpack.c.b16 %v1161, %v1160
    %v1182 = vpack.c.b16 %v1163, %v1162
    %v1183 = vpack.c.b16 %v1165, %v1164
    %v1184 = vpack.c.b16 %v1167, %v1166
    %v1185 = vpack.c.b16 %v1169, %v1168
    %1202 = vmatprep.subr.bf16.mxu0 0
    %1203 = vmatpush1.bf16.msra.mxu0 %v1170
    %1204 = vmatprep.subr.bf16.mxu0 0
    %1205 = vmatpush1.bf16.msra.mxu0 %v1171
    %1206 = vmatprep.subr.bf16.mxu0 0
    %1207 = vmatpush1.bf16.msra.mxu0 %v1172
    %1208 = vmatprep.subr.bf16.mxu0 0
    %1209 = vmatpush1.bf16.msra.mxu0 %v1173
    %1210 = vmatprep.subr.bf16.mxu0 0
    %1211 = vmatpush1.bf16.msra.mxu0 %v1174
    %1212 = vmatprep.subr.bf16.mxu0 0
    %1213 = vmatpush1.bf16.msra.mxu0 %v1175
    %1214 = vmatprep.subr.bf16.mxu0 0
    %1215 = vmatpush1.bf16.msra.mxu0 %v1176
    %1216 = vmatprep.subr.bf16.mxu0 0
    %1217 = vmatpush1.bf16.msra.mxu0 %v1177
    %1218 = vmatprep.subr.bf16.mxu0 0
    %1219 = vmatpush1.bf16.msra.mxu0 %v1178
    %1220 = vmatprep.subr.bf16.mxu0 0
    %1221 = vmatpush1.bf16.msra.mxu0 %v1179
    %1222 = vmatprep.subr.bf16.mxu0 0
    %1223 = vmatpush1.bf16.msra.mxu0 %v1180
    %1224 = vmatprep.subr.bf16.mxu0 0
    %1225 = vmatpush1.bf16.msra.mxu0 %v1181
    %1226 = vmatprep.subr.bf16.mxu0 0
    %1227 = vmatpush1.bf16.msra.mxu0 %v1182
    %1228 = vmatprep.subr.bf16.mxu0 0
    %1229 = vmatpush1.bf16.msra.mxu0 %v1183
    %1230 = vmatprep.subr.bf16.mxu0 0
    %1231 = vmatpush1.bf16.msra.mxu0 %v1184
    %1232 = vmatprep.subr.bf16.mxu0 0
    %1233 = vmatpush1.bf16.msra.mxu0 %v1185
    %1234 = vmatprep.mubr.bf16.mxu0 %v1066
    %1235 = vmatmul.mubr.bf16.gmra.mrb[0].mxu0 %v1065
    %v1236 = vpop.f32.mrb[0].mxu0
    %v1237 = vadd.f32 %v1104, %v1236
    %v1238 = vpop.f32.mrb[0].mxu0
    %v1239 = vpop.f32.mrb[0].mxu0
    %v1240 = vpop.f32.mrb[0].mxu0
    %1241 = vdwg.mxu0
    %1242 = vst [vmem:[#allocation10] sm:$0xff] %v1237
    // Predicated region
    $region46: #{tpu_custom_call.1} parent=1 // pred_check
      _
    $region47: #{tpu_custom_call.1} parent=1 // pred_check_branch
      %1244 = sbr.rel (0) target = $region49
    $region48: #{tpu_custom_call.1} parent=1 // pred_region
      %s1246 = ssub.s32 128, 128
      %1247 = vsyncadd [#allocation4], %s1246
      %s1249 = sshll.u32 [#allocation10], 4
      %s1250 = int_to_ptr.vmem [resolvable:$true] %s1249
      %1252 = dma.vmem_to_hbm [thread:$0]  %s1250, 128, %s7, [#allocation4]
    $region49: #{tpu_custom_call.1} parent=1 // pred_fallthru
      _
    // Predicated region
    $region50: #{tpu_custom_call.1} parent=1 // pred_check
      _
    $region51: #{tpu_custom_call.1} parent=1 // pred_check_branch
      %1254 = sbr.rel (0) target = $region53
    $region52: #{tpu_custom_call.1} parent=1 // pred_region
      %1255 = dma.done [#allocation4], 128
    $region53: #{tpu_custom_call.1} parent=1 // pred_fallthru
      _
    %1256 = vsyncpa [#allocation3], 1
    %1257 = vsyncpa [#allocation6], 1
    %1258 = vsyncpa [#allocation9], 1
    %1259 = vsyncpa [#allocation4], 1

</llo_original>
